<compile_context>
chip_gen: v6e
topology: v6e:2x2x1
jax: 0.10.0
libtpu: 0.0.40
codegen_flags: <defaults>
</compile_context>

<pallas_src>
import functools

import numpy as np
import jax
import jax.numpy as jnp
from jax import lax
from jax.experimental import pallas as pl
from jax.experimental.pallas import tpu as pltpu

NUM_POINTS = 6          # the angle bookkeeping in graph_inference only works for 6
H = W = 16
HW = H * W
FEAT = 8                # node-feature width: 2 coords + 6 angle slots
HIDDEN = 32
OUT_DIM = 2
BETA = 100.0

NP_PAD = 16             # node dim padded: 2*NUM_POINTS = 12 -> 16 (sublane aligned)
GROWS = 3 * NP_PAD      # rows of each per-half placement matrix: [self; fwd; bwd]

# ---- packed-constant row layout (every start is a multiple of 8) -------------
_G1_R0 = 0                      # (48, 6)  half-1 placement + ring-neighbour gather
_G2_R0 = _G1_R0 + GROWS         # (48, 6)  half-2
_HB_R0 = _G2_R0 + GROWS         # (16, 16) within-half broadcast mask
_AH_R0 = _HB_R0 + NP_PAD        # (16, 16) normalized adjacency (padded)
_S6_R0 = _AH_R0 + NP_PAD        # (16, 6)  angle -> feature-column scatter
_W1_R0 = _S6_R0 + NP_PAD        # (8, 32)
_W2_R0 = _W1_R0 + FEAT          # (32, 32)
_W3_R0 = _W2_R0 + HIDDEN        # (32, 2)  (1/12 mean-pool folded in)
PACK_ROWS = _W3_R0 + HIDDEN     # 216
PACK_COLS = HIDDEN              # 32


def _acos_f32(x):
    """arccos on [-1, 1] from guaranteed-lowerable ops (Hastings 7th order)."""
    ax = jnp.abs(x)
    p = jnp.float32(-0.0012624911)
    p = p * ax + 0.0066700901
    p = p * ax - 0.0170881256
    p = p * ax + 0.0308918810
    p = p * ax - 0.0501743046
    p = p * ax + 0.0889789874
    p = p * ax - 0.2145988016
    p = p * ax + 1.5707963050
    r = p * jnp.sqrt(1.0 - ax)
    return jnp.where(x < 0.0, np.pi - r, r)


def _graph_loss_kernel(hm1_ref, hm2_ref, net_ref, out_ref, *, beta, width):
    f32 = jnp.float32
    n = NUM_POINTS

    def softargmax(hm):                                  # hm: (n, H*W) f32
        x = hm * beta
        m = jnp.max(x, axis=-1, keepdims=True)
        e = jnp.exp(x - m)
        s = jnp.sum(e, axis=-1, keepdims=True)
        inv_s = pl.reciprocal(s, approx=True)            # EUP slot
        # coordinate grid generated in-kernel (no coords DMA, no MXU matmul);
        # width is a power of two so the floor decomposition is exact.
        flat = lax.broadcasted_iota(jnp.int32, hm.shape, 1).astype(f32)
        r_idx = jnp.floor(flat * (1.0 / width))
        c_idx = flat - r_idx * width
        pr = jnp.sum(e * r_idx, axis=-1, keepdims=True) * inv_s
        pc = jnp.sum(e * c_idx, axis=-1, keepdims=True) * inv_s
        return jnp.concatenate([pr, pc], axis=-1)        # (n, 2)

    pts1 = softargmax(hm1_ref[...])
    pts2 = softargmax(hm2_ref[...])

    # ---- node placement + ring-neighbour gather: two INDEPENDENT tiny matmuls
    g1 = net_ref[_G1_R0:_G1_R0 + GROWS, 0:n]             # (48, 6)
    g2 = net_ref[_G2_R0:_G2_R0 + GROWS, 0:n]
    s_all = (jnp.dot(g1, pts1, preferred_element_type=f32)
             + jnp.dot(g2, pts2, preferred_element_type=f32))      # (48, 2)
    p0 = s_all[0:NP_PAD]                                 # padded node coords (16,2)
    nf = s_all[NP_PAD:2 * NP_PAD]                        # forward ring neighbour
    nb = s_all[2 * NP_PAD:3 * NP_PAD]                    # backward ring neighbour

    # ---- Angle_relation_multiAngles (vectorized, VPU/EUP only) --------------
    v1 = nf - p0
    v2 = nb - p0
    dotv = jnp.sum(v1 * v2, axis=-1, keepdims=True)
    nsq = (jnp.sum(v1 * v1, axis=-1, keepdims=True)
           * jnp.sum(v2 * v2, axis=-1, keepdims=True))
    degen = nsq <= 0.0                                   # replaces isnan cleanup
    inv_nrm = lax.rsqrt(jnp.where(degen, 1.0, nsq))      # EUP slot
    cosang = jnp.clip(dotv * inv_nrm, -1.0, 1.0)         # guard |cos| > 1 rounding
    deg = _acos_f32(cosang) * (180.0 / np.pi)
    deg = jnp.where(degen, 0.0, deg)                     # torch: NaN (0/0) -> 0

    nf_zero = jnp.max(nf, axis=-1, keepdims=True) == 0.0
    nb_zero = jnp.max(nb, axis=-1, keepdims=True) == 0.0
    nf_pos = jnp.min(nf, axis=-1, keepdims=True) > 0.0
    nb_pos = jnp.min(nb, axis=-1, keepdims=True) > 0.0
    val = jnp.where(nf_zero & nb_pos, 0.0,
          jnp.where(nb_zero & nf_pos, 0.0,
          jnp.where(nf_zero & nb_zero, -1.0, deg)))
    p0_pos = jnp.min(p0, axis=-1, keepdims=True) > 0.0
    ang = jnp.where(p0_pos, val, -2.0)                   # (16, 1)

    # ---- node-feature assembly: broadcast each half's 6 angles to its nodes --
    hb = net_ref[_HB_R0:_HB_R0 + NP_PAD, 0:NP_PAD]       # (16, 16)
    s6 = net_ref[_S6_R0:_S6_R0 + NP_PAD, 0:n]            # (16, 6)
    angblk = jnp.dot(hb, ang * s6, preferred_element_type=f32)      # (16, 6)
    node_x = jnp.concatenate([p0, angblk], axis=1)       # (16, 8), lane concat

    # ---- synthetic GraphNet: 2-layer GCN -> global mean pool -> linear head --
    a = net_ref[_AH_R0:_AH_R0 + NP_PAD, 0:NP_PAD]        # padded Â (zero pad rows)
    w1 = net_ref[_W1_R0:_W1_R0 + FEAT, :]
    w2 = net_ref[_W2_R0:_W2_R0 + HIDDEN, :]
    w3 = net_ref[_W3_R0:_W3_R0 + HIDDEN, 0:OUT_DIM]
    ax = jnp.dot(a, node_x, preferred_element_type=f32)
    h1 = jnp.maximum(jnp.dot(ax, w1, preferred_element_type=f32), 0.0)
    ah1 = jnp.dot(a, h1, preferred_element_type=f32)
    h2 = jnp.maximum(jnp.dot(ah1, w2, preferred_element_type=f32), 0.0)
    pooled = jnp.sum(h2, axis=0, keepdims=True)          # 1/(2N) folded into w3
    out_ref[...] = jnp.dot(pooled, w3, preferred_element_type=f32)  # (1, 2)


class GraphContrastiveLoss:
    """JAX/Pallas re-implementation of the torch GraphContrastiveLoss module."""

    def __init__(self, num_points, key, height=H, width=W, beta=BETA):
        assert num_points == NUM_POINTS, "angle layout is only defined for 6 points"
        assert height == H and width == W, "kernel is specialized for 16x16 heatmaps"
        self.num_points = num_points
        self.height, self.width = height, width
        self.beta = float(beta)
        n, npad = num_points, NP_PAD

        # --- placement / gather matrices -------------------------------------
        e1 = np.zeros((npad, n), np.float32); e1[0:n, 0:n] = np.eye(n)
        e2 = np.zeros((npad, n), np.float32); e2[n:2 * n, 0:n] = np.eye(n)
        pf = np.zeros((npad, npad), np.float32)
        pb = np.zeros((npad, npad), np.float32)
        for base in (0, n):
            for p in range(n):
                pf[base + p, base + (p + 1) % n] = 1.0
                pb[base + p, base + (p - 1) % n] = 1.0
        g1 = np.concatenate([e1, pf @ e1, pb @ e1], axis=0)       # (48, 6)
        g2 = np.concatenate([e2, pf @ e2, pb @ e2], axis=0)

        hb = np.zeros((npad, npad), np.float32)
        hb[0:n, 0:n] = 1.0
        hb[n:2 * n, n:2 * n] = 1.0
        s6 = np.zeros((npad, n), np.float32)
        for m in range(2 * n):
            s6[m, m % n] = 1.0

        # --- normalized adjacency Â = D^-1/2 (A + I) D^-1/2, padded to 16 -----
        # TODO(synk): read_edge_index() loads a fixed edge list from disk in the
        # original repo; we synthesize a ring per half (each point has exactly 2
        # neighbours — the only topology consistent with the size-1 angle buffer).
        A = np.zeros((npad, npad), np.float32)
        for base in (0, n):
            for p in range(n):
                A[base + p, base + (p + 1) % n] = 1.0
                A[base + p, base + (p - 1) % n] = 1.0
        A[0:2 * n, 0:2 * n] += np.eye(2 * n, dtype=np.float32)
        degv = A.sum(1)
        dinv = np.where(degv > 0, 1.0 / np.sqrt(np.maximum(degv, 1e-12)), 0.0)
        a_hat = (dinv[:, None] * A * dinv[None, :]).astype(np.float32)

        # --- deterministic synthetic GraphNet parameters ----------------------
        # TODO(synk): the original loads an external pretrained GraphNet module;
        # no checkpoint exists here, so we use a fixed random 2-layer GCN.
        k1, k2, k3 = jax.random.split(key, 3)
        w1 = np.asarray(jax.random.normal(k1, (FEAT, HIDDEN), jnp.float32)) * 0.1
        w2 = np.asarray(jax.random.normal(k2, (HIDDEN, HIDDEN), jnp.float32)) * 0.1
        w3 = np.asarray(jax.random.normal(k3, (HIDDEN, OUT_DIM), jnp.float32)) * 0.1
        w3 = w3 / float(2 * n)             # fold global-mean-pool scale into head

        # --- single packed constant buffer (one DMA) --------------------------
        pack = np.zeros((PACK_ROWS, PACK_COLS), np.float32)
        pack[_G1_R0:_G1_R0 + GROWS, 0:n] = g1
        pack[_G2_R0:_G2_R0 + GROWS, 0:n] = g2
        pack[_HB_R0:_HB_R0 + npad, 0:npad] = hb
        pack[_AH_R0:_AH_R0 + npad, 0:npad] = a_hat
        pack[_S6_R0:_S6_R0 + npad, 0:n] = s6
        pack[_W1_R0:_W1_R0 + FEAT, 0:HIDDEN] = w1
        pack[_W2_R0:_W2_R0 + HIDDEN, 0:HIDDEN] = w2
        pack[_W3_R0:_W3_R0 + HIDDEN, 0:OUT_DIM] = w3
        self.netpack = jnp.asarray(pack)

        self._forward = jax.jit(self._forward_impl)

    def _forward_impl(self, heatmaps1, heatmaps2):
        n, hw = self.num_points, self.height * self.width
        B = heatmaps1.shape[0]
        hm1 = heatmaps1.reshape(B, n, hw).astype(jnp.float32)   # reshape only
        hm2 = heatmaps2.reshape(B, n, hw).astype(jnp.float32)

        kernel = functools.partial(_graph_loss_kernel, beta=self.beta,
                                   width=self.width)
        out = pl.pallas_call(
            kernel,
            out_shape=jax.ShapeDtypeStruct((B, 1, OUT_DIM), jnp.float32),
            grid=(B,),
            in_specs=[
                pl.BlockSpec((None, n, hw), lambda b: (b, 0, 0)),
                pl.BlockSpec((None, n, hw), lambda b: (b, 0, 0)),
                # constants: block index never changes -> fetched once
                pl.BlockSpec((PACK_ROWS, PACK_COLS), lambda b: (0, 0)),
            ],
            out_specs=pl.BlockSpec((None, 1, OUT_DIM), lambda b: (b, 0, 0)),
            compiler_params=pltpu.CompilerParams(
                dimension_semantics=("parallel",),
                vmem_limit_bytes=32 * 1024 * 1024,
            ),
            cost_estimate=pl.CostEstimate(
                flops=80_000 * B,
                transcendentals=3_200 * B,
                bytes_accessed=2 * n * hw * 4 * B + PACK_ROWS * PACK_COLS * 4,
            ),
        )(hm1, hm2, self.netpack)
        return out[:, 0, :]                                     # (B, 2)

    def __call__(self, heatmaps1, heatmaps2):
        if heatmaps1.ndim == 3:            # original single-pair semantics
            return self._forward(heatmaps1[None], heatmaps2[None])   # (1, 2)
        return self._forward(heatmaps1, heatmaps2)                    # (B, 2)


if __name__ == "__main__":
    key = jax.random.PRNGKey(0)
    k_hm1, k_hm2, k_net, k_b1, k_b2 = jax.random.split(key, 5)

    # original module interface: one pair of (num_points, H, W) heatmaps
    heatmaps1 = jax.random.normal(k_hm1, (NUM_POINTS, H, W), jnp.float32)
    heatmaps2 = jax.random.normal(k_hm2, (NUM_POINTS, H, W), jnp.float32)
    loss_mod = GraphContrastiveLoss(NUM_POINTS, k_net)
    out = loss_mod(heatmaps1, heatmaps2)
    jax.block_until_ready(out)

    # batched path exercising the parallel grid (one heatmap pair per grid step)
    bh1 = jax.random.normal(k_b1, (4, NUM_POINTS, H, W), jnp.float32)
    bh2 = jax.random.normal(k_b2, (4, NUM_POINTS, H, W), jnp.float32)
    out_b = loss_mod(bh1, bh2)
    jax.block_until_ready(out_b)

    print("KERNEL_OK")
</pallas_src>

<mosaic_0001>
module attributes {stable_mosaic.version = 11 : i64} {
  func.func @_graph_loss_kernel(%arg0: i32, %arg1: memref<1x6x256xf32, #tpu.memory_space<vmem>>, %arg2: memref<1x6x256xf32, #tpu.memory_space<vmem>>, %arg3: memref<216x32xf32, #tpu.memory_space<vmem>>, %arg4: memref<1x1x2xf32, #tpu.memory_space<vmem>>) attributes {dimension_semantics = [#tpu.dimension_semantics<parallel>], iteration_bounds = array<i64: 1>, scalar_prefetch = 0 : i64, scratch_operands = 0 : i64, tpu.core_type = #tpu.core_type<tc>, window_params = [{transform_indices = @transform_0, window_bounds = array<i64: 1, 6, 256>}, {transform_indices = @transform_1, window_bounds = array<i64: 1, 6, 256>}, {pipeline_mode = #tpu.pipeline_mode<synchronous>, transform_indices = @transform_2, window_bounds = array<i64: 216, 32>}, {transform_indices = @transform_3, window_bounds = array<i64: 1, 1, 2>}]} {
    %c0 = arith.constant 0 : index
    %c0_0 = arith.constant 0 : index
    %c0_1 = arith.constant 0 : index
    %0 = vector.load %arg1[%c0, %c0_0, %c0_1] : memref<1x6x256xf32, #tpu.memory_space<vmem>>, vector<1x6x256xf32>
    %1 = vector.shape_cast %0 : vector<1x6x256xf32> to vector<6x256xf32>
    %cst = arith.constant 1.000000e+02 : f32
    %2 = vector.broadcast %cst : f32 to vector<6x256xf32>
    %3 = arith.mulf %1, %2 : vector<6x256xf32>
    %cst_2 = arith.constant dense<0xFF800000> : vector<6xf32>
    %4 = vector.multi_reduction <maximumf>, %3, %cst_2 [1] : vector<6x256xf32> to vector<6xf32>
    %5 = vector.shape_cast %4 : vector<6xf32> to vector<6x1xf32>
    %6 = vector.broadcast %5 : vector<6x1xf32> to vector<6x256xf32>
    %7 = arith.subf %3, %6 : vector<6x256xf32>
    %8 = math.exp %7 : vector<6x256xf32>
    %cst_3 = arith.constant dense<0.000000e+00> : vector<6xf32>
    %9 = vector.multi_reduction <add>, %8, %cst_3 [1] : vector<6x256xf32> to vector<6xf32>
    %10 = vector.shape_cast %9 : vector<6xf32> to vector<6x1xf32>
    %11 = tpu.reciprocal %10 {approx = true} : vector<6x1xf32> -> vector<6x1xf32>
    %12 = tpu.iota {dimensions = array<i32: 1>} : vector<6x256xi32>
    %13 = arith.sitofp %12 : vector<6x256xi32> to vector<6x256xf32>
    %cst_4 = arith.constant 6.250000e-02 : f32
    %14 = vector.broadcast %cst_4 : f32 to vector<6x256xf32>
    %15 = arith.mulf %13, %14 : vector<6x256xf32>
    %16 = math.floor %15 : vector<6x256xf32>
    %cst_5 = arith.constant 1.600000e+01 : f32
    %17 = vector.broadcast %cst_5 : f32 to vector<6x256xf32>
    %18 = arith.mulf %16, %17 : vector<6x256xf32>
    %19 = arith.subf %13, %18 : vector<6x256xf32>
    %20 = arith.mulf %8, %16 : vector<6x256xf32>
    %cst_6 = arith.constant dense<0.000000e+00> : vector<6xf32>
    %21 = vector.multi_reduction <add>, %20, %cst_6 [1] : vector<6x256xf32> to vector<6xf32>
    %22 = vector.shape_cast %21 : vector<6xf32> to vector<6x1xf32>
    %23 = arith.mulf %22, %11 : vector<6x1xf32>
    %24 = arith.mulf %8, %19 : vector<6x256xf32>
    %cst_7 = arith.constant dense<0.000000e+00> : vector<6xf32>
    %25 = vector.multi_reduction <add>, %24, %cst_7 [1] : vector<6x256xf32> to vector<6xf32>
    %26 = vector.shape_cast %25 : vector<6xf32> to vector<6x1xf32>
    %27 = arith.mulf %26, %11 : vector<6x1xf32>
    %28 = tpu.concatenate %23, %27 in 1 : vector<6x1xf32>, vector<6x1xf32> -> vector<6x2xf32>
    %c0_8 = arith.constant 0 : index
    %c0_9 = arith.constant 0 : index
    %c0_10 = arith.constant 0 : index
    %29 = vector.load %arg2[%c0_8, %c0_9, %c0_10] : memref<1x6x256xf32, #tpu.memory_space<vmem>>, vector<1x6x256xf32>
    %30 = vector.shape_cast %29 : vector<1x6x256xf32> to vector<6x256xf32>
    %cst_11 = arith.constant 1.000000e+02 : f32
    %31 = vector.broadcast %cst_11 : f32 to vector<6x256xf32>
    %32 = arith.mulf %30, %31 : vector<6x256xf32>
    %cst_12 = arith.constant dense<0xFF800000> : vector<6xf32>
    %33 = vector.multi_reduction <maximumf>, %32, %cst_12 [1] : vector<6x256xf32> to vector<6xf32>
    %34 = vector.shape_cast %33 : vector<6xf32> to vector<6x1xf32>
    %35 = vector.broadcast %34 : vector<6x1xf32> to vector<6x256xf32>
    %36 = arith.subf %32, %35 : vector<6x256xf32>
    %37 = math.exp %36 : vector<6x256xf32>
    %cst_13 = arith.constant dense<0.000000e+00> : vector<6xf32>
    %38 = vector.multi_reduction <add>, %37, %cst_13 [1] : vector<6x256xf32> to vector<6xf32>
    %39 = vector.shape_cast %38 : vector<6xf32> to vector<6x1xf32>
    %40 = tpu.reciprocal %39 {approx = true} : vector<6x1xf32> -> vector<6x1xf32>
    %41 = tpu.iota {dimensions = array<i32: 1>} : vector<6x256xi32>
    %42 = arith.sitofp %41 : vector<6x256xi32> to vector<6x256xf32>
    %cst_14 = arith.constant 6.250000e-02 : f32
    %43 = vector.broadcast %cst_14 : f32 to vector<6x256xf32>
    %44 = arith.mulf %42, %43 : vector<6x256xf32>
    %45 = math.floor %44 : vector<6x256xf32>
    %cst_15 = arith.constant 1.600000e+01 : f32
    %46 = vector.broadcast %cst_15 : f32 to vector<6x256xf32>
    %47 = arith.mulf %45, %46 : vector<6x256xf32>
    %48 = arith.subf %42, %47 : vector<6x256xf32>
    %49 = arith.mulf %37, %45 : vector<6x256xf32>
    %cst_16 = arith.constant dense<0.000000e+00> : vector<6xf32>
    %50 = vector.multi_reduction <add>, %49, %cst_16 [1] : vector<6x256xf32> to vector<6xf32>
    %51 = vector.shape_cast %50 : vector<6xf32> to vector<6x1xf32>
    %52 = arith.mulf %51, %40 : vector<6x1xf32>
    %53 = arith.mulf %37, %48 : vector<6x256xf32>
    %cst_17 = arith.constant dense<0.000000e+00> : vector<6xf32>
    %54 = vector.multi_reduction <add>, %53, %cst_17 [1] : vector<6x256xf32> to vector<6xf32>
    %55 = vector.shape_cast %54 : vector<6xf32> to vector<6x1xf32>
    %56 = arith.mulf %55, %40 : vector<6x1xf32>
    %57 = tpu.concatenate %52, %56 in 1 : vector<6x1xf32>, vector<6x1xf32> -> vector<6x2xf32>
    %c0_18 = arith.constant 0 : index
    %c0_19 = arith.constant 0 : index
    %58 = vector.load %arg3[%c0_18, %c0_19] : memref<216x32xf32, #tpu.memory_space<vmem>>, vector<48x6xf32>
    %c48 = arith.constant 48 : index
    %c0_20 = arith.constant 0 : index
    %59 = vector.load %arg3[%c48, %c0_20] : memref<216x32xf32, #tpu.memory_space<vmem>>, vector<48x6xf32>
    %cst_21 = arith.constant dense<0.000000e+00> : vector<48x2xf32>
    %60 = tpu.matmul %58, %28, %cst_21 {dimension_numbers = #tpu.dot_dimension_numbers<[1], [0], [0], [1], [0, 0, 1, 1], [], []>} : vector<48x6xf32>, vector<6x2xf32>, vector<48x2xf32> -> vector<48x2xf32>
    %cst_22 = arith.constant dense<0.000000e+00> : vector<48x2xf32>
    %61 = tpu.matmul %59, %57, %cst_22 {dimension_numbers = #tpu.dot_dimension_numbers<[1], [0], [0], [1], [0, 0, 1, 1], [], []>} : vector<48x6xf32>, vector<6x2xf32>, vector<48x2xf32> -> vector<48x2xf32>
    %62 = arith.addf %60, %61 : vector<48x2xf32>
    %63 = vector.extract_strided_slice %62 {offsets = [0, 0], sizes = [16, 2], strides = [1, 1]} : vector<48x2xf32> to vector<16x2xf32>
    %64 = vector.extract_strided_slice %62 {offsets = [16, 0], sizes = [16, 2], strides = [1, 1]} : vector<48x2xf32> to vector<16x2xf32>
    %65 = vector.extract_strided_slice %62 {offsets = [32, 0], sizes = [16, 2], strides = [1, 1]} : vector<48x2xf32> to vector<16x2xf32>
    %66 = arith.subf %64, %63 : vector<16x2xf32>
    %67 = arith.subf %65, %63 : vector<16x2xf32>
    %68 = arith.mulf %66, %67 : vector<16x2xf32>
    %cst_23 = arith.constant dense<0.000000e+00> : vector<16xf32>
    %69 = vector.multi_reduction <add>, %68, %cst_23 [1] : vector<16x2xf32> to vector<16xf32>
    %70 = vector.shape_cast %69 : vector<16xf32> to vector<16x1xf32>
    %71 = arith.mulf %66, %66 : vector<16x2xf32>
    %cst_24 = arith.constant dense<0.000000e+00> : vector<16xf32>
    %72 = vector.multi_reduction <add>, %71, %cst_24 [1] : vector<16x2xf32> to vector<16xf32>
    %73 = vector.shape_cast %72 : vector<16xf32> to vector<16x1xf32>
    %74 = arith.mulf %67, %67 : vector<16x2xf32>
    %cst_25 = arith.constant dense<0.000000e+00> : vector<16xf32>
    %75 = vector.multi_reduction <add>, %74, %cst_25 [1] : vector<16x2xf32> to vector<16xf32>
    %76 = vector.shape_cast %75 : vector<16xf32> to vector<16x1xf32>
    %77 = arith.mulf %73, %76 : vector<16x1xf32>
    %cst_26 = arith.constant 0.000000e+00 : f32
    %78 = vector.broadcast %cst_26 : f32 to vector<16x1xf32>
    %79 = arith.cmpf ole, %77, %78 : vector<16x1xf32>
    %cst_27 = arith.constant 1.000000e+00 : f32
    %80 = vector.broadcast %cst_27 : f32 to vector<16x1xf32>
    %81 = arith.select %79, %80, %77 : vector<16x1xi1>, vector<16x1xf32>
    %82 = math.rsqrt %81 : vector<16x1xf32>
    %83 = arith.mulf %70, %82 : vector<16x1xf32>
    %cst_28 = arith.constant -1.000000e+00 : f32
    %cst_29 = arith.constant 1.000000e+00 : f32
    %84 = vector.broadcast %cst_28 : f32 to vector<16x1xf32>
    %85 = arith.maximumf %84, %83 : vector<16x1xf32>
    %86 = vector.broadcast %cst_29 : f32 to vector<16x1xf32>
    %87 = arith.minimumf %86, %85 : vector<16x1xf32>
    %88 = math.absf %87 : vector<16x1xf32>
    %cst_30 = arith.constant -0.0012624911 : f32
    %89 = vector.broadcast %cst_30 : f32 to vector<16x1xf32>
    %90 = arith.mulf %89, %88 : vector<16x1xf32>
    %cst_31 = arith.constant 6.670090e-03 : f32
    %91 = vector.broadcast %cst_31 : f32 to vector<16x1xf32>
    %92 = arith.addf %90, %91 : vector<16x1xf32>
    %93 = arith.mulf %92, %88 : vector<16x1xf32>
    %cst_32 = arith.constant 0.0170881264 : f32
    %94 = vector.broadcast %cst_32 : f32 to vector<16x1xf32>
    %95 = arith.subf %93, %94 : vector<16x1xf32>
    %96 = arith.mulf %95, %88 : vector<16x1xf32>
    %cst_33 = arith.constant 0.0308918804 : f32
    %97 = vector.broadcast %cst_33 : f32 to vector<16x1xf32>
    %98 = arith.addf %96, %97 : vector<16x1xf32>
    %99 = arith.mulf %98, %88 : vector<16x1xf32>
    %cst_34 = arith.constant 0.0501743034 : f32
    %100 = vector.broadcast %cst_34 : f32 to vector<16x1xf32>
    %101 = arith.subf %99, %100 : vector<16x1xf32>
    %102 = arith.mulf %101, %88 : vector<16x1xf32>
    %cst_35 = arith.constant 0.0889789909 : f32
    %103 = vector.broadcast %cst_35 : f32 to vector<16x1xf32>
    %104 = arith.addf %102, %103 : vector<16x1xf32>
    %105 = arith.mulf %104, %88 : vector<16x1xf32>
    %cst_36 = arith.constant 0.214598805 : f32
    %106 = vector.broadcast %cst_36 : f32 to vector<16x1xf32>
    %107 = arith.subf %105, %106 : vector<16x1xf32>
    %108 = arith.mulf %107, %88 : vector<16x1xf32>
    %cst_37 = arith.constant 1.57079625 : f32
    %109 = vector.broadcast %cst_37 : f32 to vector<16x1xf32>
    %110 = arith.addf %108, %109 : vector<16x1xf32>
    %cst_38 = arith.constant 1.000000e+00 : f32
    %111 = vector.broadcast %cst_38 : f32 to vector<16x1xf32>
    %112 = arith.subf %111, %88 : vector<16x1xf32>
    %113 = math.sqrt %112 : vector<16x1xf32>
    %114 = arith.mulf %110, %113 : vector<16x1xf32>
    %cst_39 = arith.constant 0.000000e+00 : f32
    %115 = vector.broadcast %cst_39 : f32 to vector<16x1xf32>
    %116 = arith.cmpf olt, %87, %115 : vector<16x1xf32>
    %cst_40 = arith.constant 3.14159274 : f32
    %117 = vector.broadcast %cst_40 : f32 to vector<16x1xf32>
    %118 = arith.subf %117, %114 : vector<16x1xf32>
    %119 = arith.select %116, %118, %114 : vector<16x1xi1>, vector<16x1xf32>
    %cst_41 = arith.constant 57.2957802 : f32
    %120 = vector.broadcast %cst_41 : f32 to vector<16x1xf32>
    %121 = arith.mulf %119, %120 : vector<16x1xf32>
    %cst_42 = arith.constant 0.000000e+00 : f32
    %122 = vector.broadcast %cst_42 : f32 to vector<16x1xf32>
    %123 = arith.select %79, %122, %121 : vector<16x1xi1>, vector<16x1xf32>
    %cst_43 = arith.constant dense<0xFF800000> : vector<16xf32>
    %124 = vector.multi_reduction <maximumf>, %64, %cst_43 [1] : vector<16x2xf32> to vector<16xf32>
    %125 = vector.shape_cast %124 : vector<16xf32> to vector<16x1xf32>
    %cst_44 = arith.constant 0.000000e+00 : f32
    %126 = vector.broadcast %cst_44 : f32 to vector<16x1xf32>
    %127 = arith.cmpf oeq, %125, %126 : vector<16x1xf32>
    %cst_45 = arith.constant dense<0xFF800000> : vector<16xf32>
    %128 = vector.multi_reduction <maximumf>, %65, %cst_45 [1] : vector<16x2xf32> to vector<16xf32>
    %129 = vector.shape_cast %128 : vector<16xf32> to vector<16x1xf32>
    %cst_46 = arith.constant 0.000000e+00 : f32
    %130 = vector.broadcast %cst_46 : f32 to vector<16x1xf32>
    %131 = arith.cmpf oeq, %129, %130 : vector<16x1xf32>
    %cst_47 = arith.constant dense<0x7F800000> : vector<16xf32>
    %132 = vector.multi_reduction <minimumf>, %64, %cst_47 [1] : vector<16x2xf32> to vector<16xf32>
    %133 = vector.shape_cast %132 : vector<16xf32> to vector<16x1xf32>
    %cst_48 = arith.constant 0.000000e+00 : f32
    %134 = vector.broadcast %cst_48 : f32 to vector<16x1xf32>
    %135 = arith.cmpf ogt, %133, %134 : vector<16x1xf32>
    %cst_49 = arith.constant dense<0x7F800000> : vector<16xf32>
    %136 = vector.multi_reduction <minimumf>, %65, %cst_49 [1] : vector<16x2xf32> to vector<16xf32>
    %137 = vector.shape_cast %136 : vector<16xf32> to vector<16x1xf32>
    %cst_50 = arith.constant 0.000000e+00 : f32
    %138 = vector.broadcast %cst_50 : f32 to vector<16x1xf32>
    %139 = arith.cmpf ogt, %137, %138 : vector<16x1xf32>
    %140 = arith.andi %127, %139 : vector<16x1xi1>
    %141 = arith.andi %131, %135 : vector<16x1xi1>
    %142 = arith.andi %127, %131 : vector<16x1xi1>
    %cst_51 = arith.constant -1.000000e+00 : f32
    %143 = vector.broadcast %cst_51 : f32 to vector<16x1xf32>
    %144 = arith.select %142, %143, %123 : vector<16x1xi1>, vector<16x1xf32>
    %cst_52 = arith.constant 0.000000e+00 : f32
    %145 = vector.broadcast %cst_52 : f32 to vector<16x1xf32>
    %146 = arith.select %141, %145, %144 : vector<16x1xi1>, vector<16x1xf32>
    %cst_53 = arith.constant 0.000000e+00 : f32
    %147 = vector.broadcast %cst_53 : f32 to vector<16x1xf32>
    %148 = arith.select %140, %147, %146 : vector<16x1xi1>, vector<16x1xf32>
    %cst_54 = arith.constant dense<0x7F800000> : vector<16xf32>
    %149 = vector.multi_reduction <minimumf>, %63, %cst_54 [1] : vector<16x2xf32> to vector<16xf32>
    %150 = vector.shape_cast %149 : vector<16xf32> to vector<16x1xf32>
    %cst_55 = arith.constant 0.000000e+00 : f32
    %151 = vector.broadcast %cst_55 : f32 to vector<16x1xf32>
    %152 = arith.cmpf ogt, %150, %151 : vector<16x1xf32>
    %cst_56 = arith.constant -2.000000e+00 : f32
    %153 = vector.broadcast %cst_56 : f32 to vector<16x1xf32>
    %154 = arith.select %152, %148, %153 : vector<16x1xi1>, vector<16x1xf32>
    %c96 = arith.constant 96 : index
    %c0_57 = arith.constant 0 : index
    %155 = vector.load %arg3[%c96, %c0_57] : memref<216x32xf32, #tpu.memory_space<vmem>>, vector<16x16xf32>
    %c128 = arith.constant 128 : index
    %c0_58 = arith.constant 0 : index
    %156 = vector.load %arg3[%c128, %c0_58] : memref<216x32xf32, #tpu.memory_space<vmem>>, vector<16x6xf32>
    %157 = vector.broadcast %154 : vector<16x1xf32> to vector<16x6xf32>
    %158 = arith.mulf %157, %156 : vector<16x6xf32>
    %cst_59 = arith.constant dense<0.000000e+00> : vector<16x6xf32>
    %159 = tpu.matmul %155, %158, %cst_59 {dimension_numbers = #tpu.dot_dimension_numbers<[1], [0], [0], [1], [0, 0, 1, 1], [], []>} : vector<16x16xf32>, vector<16x6xf32>, vector<16x6xf32> -> vector<16x6xf32>
    %160 = tpu.concatenate %63, %159 in 1 : vector<16x2xf32>, vector<16x6xf32> -> vector<16x8xf32>
    %c112 = arith.constant 112 : index
    %c0_60 = arith.constant 0 : index
    %161 = vector.load %arg3[%c112, %c0_60] : memref<216x32xf32, #tpu.memory_space<vmem>>, vector<16x16xf32>
    %c144 = arith.constant 144 : index
    %c0_61 = arith.constant 0 : index
    %162 = vector.load %arg3[%c144, %c0_61] : memref<216x32xf32, #tpu.memory_space<vmem>>, vector<8x32xf32>
    %c152 = arith.constant 152 : index
    %c0_62 = arith.constant 0 : index
    %163 = vector.load %arg3[%c152, %c0_62] : memref<216x32xf32, #tpu.memory_space<vmem>>, vector<32x32xf32>
    %c184 = arith.constant 184 : index
    %c0_63 = arith.constant 0 : index
    %164 = vector.load %arg3[%c184, %c0_63] : memref<216x32xf32, #tpu.memory_space<vmem>>, vector<32x2xf32>
    %cst_64 = arith.constant dense<0.000000e+00> : vector<16x8xf32>
    %165 = tpu.matmul %161, %160, %cst_64 {dimension_numbers = #tpu.dot_dimension_numbers<[1], [0], [0], [1], [0, 0, 1, 1], [], []>} : vector<16x16xf32>, vector<16x8xf32>, vector<16x8xf32> -> vector<16x8xf32>
    %cst_65 = arith.constant dense<0.000000e+00> : vector<16x32xf32>
    %166 = tpu.matmul %165, %162, %cst_65 {dimension_numbers = #tpu.dot_dimension_numbers<[1], [0], [0], [1], [0, 0, 1, 1], [], []>} : vector<16x8xf32>, vector<8x32xf32>, vector<16x32xf32> -> vector<16x32xf32>
    %cst_66 = arith.constant 0.000000e+00 : f32
    %167 = vector.broadcast %cst_66 : f32 to vector<16x32xf32>
    %168 = arith.maximumf %166, %167 : vector<16x32xf32>
    %cst_67 = arith.constant dense<0.000000e+00> : vector<16x32xf32>
    %169 = tpu.matmul %161, %168, %cst_67 {dimension_numbers = #tpu.dot_dimension_numbers<[1], [0], [0], [1], [0, 0, 1, 1], [], []>} : vector<16x16xf32>, vector<16x32xf32>, vector<16x32xf32> -> vector<16x32xf32>
    %cst_68 = arith.constant dense<0.000000e+00> : vector<16x32xf32>
    %170 = tpu.matmul %169, %163, %cst_68 {dimension_numbers = #tpu.dot_dimension_numbers<[1], [0], [0], [1], [0, 0, 1, 1], [], []>} : vector<16x32xf32>, vector<32x32xf32>, vector<16x32xf32> -> vector<16x32xf32>
    %cst_69 = arith.constant 0.000000e+00 : f32
    %171 = vector.broadcast %cst_69 : f32 to vector<16x32xf32>
    %172 = arith.maximumf %170, %171 : vector<16x32xf32>
    %cst_70 = arith.constant dense<0.000000e+00> : vector<32xf32>
    %173 = vector.multi_reduction <add>, %172, %cst_70 [0] : vector<16x32xf32> to vector<32xf32>
    %174 = vector.shape_cast %173 : vector<32xf32> to vector<1x32xf32>
    %cst_71 = arith.constant dense<0.000000e+00> : vector<1x2xf32>
    %175 = tpu.matmul %174, %164, %cst_71 {dimension_numbers = #tpu.dot_dimension_numbers<[1], [0], [0], [1], [0, 0, 1, 1], [], []>} : vector<1x32xf32>, vector<32x2xf32>, vector<1x2xf32> -> vector<1x2xf32>
    %c0_72 = arith.constant 0 : index
    %c0_73 = arith.constant 0 : index
    %c0_74 = arith.constant 0 : index
    %176 = vector.load %arg4[%c0_72, %c0_73, %c0_74] : memref<1x1x2xf32, #tpu.memory_space<vmem>>, vector<1x1x2xf32>
    %177 = vector.shape_cast %176 : vector<1x1x2xf32> to vector<1x2xf32>
    %178 = vector.shape_cast %175 : vector<1x2xf32> to vector<1x1x2xf32>
    tpu.vector_store %arg4[%c0_72, %c0_73, %c0_74], %178 {strides = array<i32>} : memref<1x1x2xf32, #tpu.memory_space<vmem>>, vector<1x1x2xf32>,
    return
  }
  func.func @transform_0(%arg0: i32) -> (i32, i32, i32) {
    %c0_i32 = arith.constant 0 : i32
    %c0_i32_0 = arith.constant 0 : i32
    %c0_i32_1 = arith.constant 0 : i32
    return %arg0, %c0_i32, %c0_i32_0 : i32, i32, i32
  }
  func.func @transform_1(%arg0: i32) -> (i32, i32, i32) {
    %c0_i32 = arith.constant 0 : i32
    %c0_i32_0 = arith.constant 0 : i32
    %c0_i32_1 = arith.constant 0 : i32
    return %arg0, %c0_i32, %c0_i32_0 : i32, i32, i32
  }
  func.func @transform_2(%arg0: i32) -> (i32, i32) {
    %c0_i32 = arith.constant 0 : i32
    %c0_i32_0 = arith.constant 0 : i32
    %c0_i32_1 = arith.constant 0 : i32
    return %c0_i32, %c0_i32_0 : i32, i32
  }
  func.func @transform_3(%arg0: i32) -> (i32, i32, i32) {
    %c0_i32 = arith.constant 0 : i32
    %c0_i32_0 = arith.constant 0 : i32
    %c0_i32_1 = arith.constant 0 : i32
    return %arg0, %c0_i32, %c0_i32_0 : i32, i32, i32
  }
}

</mosaic_0001>

<llo_original>
// kernel: _forward_impl.1
$region0: #{_forward_impl.1}
  #allocation0 [shape = 'u32[]', space=smem, size = 0x4, offset = 0x4, fixed_abs, tag = 'smem constant byte address 0x4 - core index']
  #allocation1 [shape = 'u32[144,128]{1,0:T(1,128)}', space=vmem, size = 0x12000, scoped, tag = 'internal scratch']
  %s0 = inlined_call_operand.vmem [shape: f32[1,6,256], index: 0, kind: input, shape index: {}]
  %s1 = inlined_call_operand.vmem [shape: f32[1,6,256], index: 1, kind: input, shape index: {}]
  %s2 = inlined_call_operand.vmem [shape: f32[216,32], index: 2, kind: input, shape index: {}]
  %s3 = inlined_call_operand.hbm [shape: f32[1,1,2], index: 3, kind: output, shape index: {}]
  %s4 = sld [smem:[#allocation0]]
  $region22: #{_forward_impl.1} parent=0
    _
  %s6 = ssub.s32 1, %s4
  %s7 = scalar_select 0, %s6, %s4
  $region1: #{_forward_impl.1} parent=0
    #allocation2 [shape = 'u8[512]{0}', space=vmem, size = 0x400, scoped, tag = 'output window, operand 0, single buffered']
    #allocation3 [shape = 's32[1]{0}', space=sflag, size = 0x4, scoped, tag = 'scoped memory for _forward_impl.1']
    %8 = vsyncpa [#allocation3], 0
    // Predicated region
    $region2: #{_forward_impl.1} parent=1 // pred_check
      _
    $region3: #{_forward_impl.1} parent=1 // pred_check_branch
      %10 = sbr.rel (0) target = $region5
    $region4: #{_forward_impl.1} parent=1 // pred_region
      _
    $region5: #{_forward_impl.1} parent=1 // pred_fallthru
      _
    // Predicated region
    $region6: #{_forward_impl.1} parent=1 // pred_check
      _
    $region7: #{_forward_impl.1} parent=1 // pred_check_branch
      %12 = sbr.rel (0) target = $region9
    $region8: #{_forward_impl.1} parent=1 // pred_region
      _
    $region9: #{_forward_impl.1} parent=1 // pred_fallthru
      _
    // Predicated region
    $region10: #{_forward_impl.1} parent=1 // pred_check
      _
    $region11: #{_forward_impl.1} parent=1 // pred_check_branch
      %14 = sbr.rel (0) target = $region13
    $region12: #{_forward_impl.1} parent=1 // pred_region
      _
    $region13: #{_forward_impl.1} parent=1 // pred_fallthru
      _
    %v15 = vld [vmem:[%s0] sm:$0x3f]
    %v16 = vld [vmem:[%s0 + $0x8] sm:$0x3f]
    %v17 = vmul.f32 %v15, 100.0
    %v18 = vmul.f32 %v16, 100.0
    %vm19 = vcmask 1045504
    %v20 = vsel %vm19, %v17, -inf
    %v21 = vsel %vm19, %v18, -inf
    %v22 = vmax.f32 %v20, %v21
    %23 = vmax.xlane.f32.xlu0 %v22
    %v24 = vpop.xlane.xlu0 %23
    %v25 = vsub.f32 %v17, %v24
    %v26 = vsub.f32 %v18, %v24
    %v27 = vmul.f32 %v25, 1.442695
    %v28 = vpow.pop %v27
    %v29 = vmul.f32 %v26, 1.442695
    %v30 = vpow.pop %v29
    %v31 = vsel %vm19, %v28, 0.0
    %v32 = vsel %vm19, %v30, 0.0
    %v33 = vadd.f32 %v31, %v32
    %34 = vadd.xlane.f32.xlu0 %v33
    %v35 = vpop.xlane.xlu0 %34
    %v36 = vrcp.pop %v35
    %v37 = vlaneseq
    %v38 = vand.u32 %v37, 127
    %v39 = vadd.s32 %v38, 128
    %v40 = vcvt.s32.f32 %v38
    %v41 = vcvt.s32.f32 %v39
    %v42 = vmul.f32 %v40, 0.0625
    %v43 = vmul.f32 %v41, 0.0625
    %v44 = vfloor.f32 %v42
    %v45 = vfloor.f32 %v43
    %v46 = vmul.f32 %v44, 16.0
    %v47 = vmul.f32 %v45, 16.0
    %v48 = vsub.f32 %v40, %v46
    %v49 = vsub.f32 %v41, %v47
    %v50 = vmul.f32 %v28, %v44
    %v51 = vmul.f32 %v30, %v45
    %v52 = vsel %vm19, %v50, 0.0
    %v53 = vsel %vm19, %v51, 0.0
    %v54 = vadd.f32 %v52, %v53
    %55 = vadd.xlane.f32.xlu0 %v54
    %v56 = vpop.xlane.xlu0 %55
    %v57 = vmul.f32 %v56, %v36
    %v58 = vmul.f32 %v28, %v48
    %v59 = vmul.f32 %v30, %v49
    %v60 = vsel %vm19, %v58, 0.0
    %v61 = vsel %vm19, %v59, 0.0
    %v62 = vadd.f32 %v60, %v61
    %63 = vadd.xlane.f32.xlu0 %v62
    %v64 = vpop.xlane.xlu0 %63
    %v65 = vmul.f32 %v64, %v36
    %vm66 = vcmask 7168
    %v67 = vsel %vm66, %v57, %v65
    %v68 = vld [vmem:[%s1] sm:$0x3f]
    %v69 = vld [vmem:[%s1 + $0x8] sm:$0x3f]
    %v70 = vmul.f32 %v68, 100.0
    %v71 = vmul.f32 %v69, 100.0
    %v72 = vsel %vm19, %v70, -inf
    %v73 = vsel %vm19, %v71, -inf
    %v74 = vmax.f32 %v72, %v73
    %75 = vmax.xlane.f32.xlu0 %v74
    %v76 = vpop.xlane.xlu0 %75
    %v77 = vsub.f32 %v70, %v76
    %v78 = vsub.f32 %v71, %v76
    %v79 = vmul.f32 %v77, 1.442695
    %v80 = vpow.pop %v79
    %v81 = vmul.f32 %v78, 1.442695
    %v82 = vpow.pop %v81
    %v83 = vsel %vm19, %v80, 0.0
    %v84 = vsel %vm19, %v82, 0.0
    %v85 = vadd.f32 %v83, %v84
    %86 = vadd.xlane.f32.xlu0 %v85
    %v87 = vpop.xlane.xlu0 %86
    %v88 = vrcp.pop %v87
    %v89 = vmul.f32 %v80, %v44
    %v90 = vmul.f32 %v82, %v45
    %v91 = vsel %vm19, %v89, 0.0
    %v92 = vsel %vm19, %v90, 0.0
    %v93 = vadd.f32 %v91, %v92
    %94 = vadd.xlane.f32.xlu0 %v93
    %v95 = vpop.xlane.xlu0 %94
    %v96 = vmul.f32 %v95, %v88
    %v97 = vmul.f32 %v80, %v48
    %v98 = vmul.f32 %v82, %v49
    %v99 = vsel %vm19, %v97, 0.0
    %v100 = vsel %vm19, %v98, 0.0
    %v101 = vadd.f32 %v99, %v100
    %102 = vadd.xlane.f32.xlu0 %v101
    %v103 = vpop.xlane.xlu0 %102
    %v104 = vmul.f32 %v103, %v88
    %v105 = vsel %vm66, %v96, %v104
    %v106 = vld [vmem:[%s2] sm:$0xff]
    %v107 = vld [vmem:[%s2 + $0x8] sm:$0xff]
    %v108 = vld [vmem:[%s2 + $0x10] sm:$0xff]
    %v109 = vld [vmem:[%s2 + $0x18] sm:$0xff]
    %v110 = vld [vmem:[%s2 + $0x20] sm:$0xff]
    %v111 = vld [vmem:[%s2 + $0x28] sm:$0xff]
    %v112 = vld [vmem:[%s2 + $0x30] sm:$0xff]
    %v113 = vld [vmem:[%s2 + $0x38] sm:$0xff]
    %v114 = vld [vmem:[%s2 + $0x40] sm:$0xff]
    %v115 = vld [vmem:[%s2 + $0x48] sm:$0xff]
    %v116 = vld [vmem:[%s2 + $0x50] sm:$0xff]
    %v117 = vld [vmem:[%s2 + $0x58] sm:$0xff]
    %vm118 = vcmask 48128
    %v120 = vsel %vm118, %v112, 0
    %v123 = vsel %vm118, %v113, 0
    %v126 = vsel %vm118, %v114, 0
    %v129 = vsel %vm118, %v115, 0
    %v132 = vsel %vm118, %v116, 0
    %v135 = vsel %vm118, %v117, 0
    %v138 = vsel %vm19, %v105, 0
    %140 = vmatprep.subr.mxu0 0.0
    %141 = vmatpush1.msra.mxu0 0.0
    %142 = vmatprep.subr.mxu0 0.0
    %143 = vmatpush1.msra.mxu0 0.0
    %144 = vmatprep.subr.mxu0 0.0
    %145 = vmatpush1.msra.mxu0 0.0
    %146 = vmatprep.subr.mxu0 0.0
    %147 = vmatpush1.msra.mxu0 0.0
    %148 = vmatprep.subr.mxu0 0.0
    %149 = vmatpush1.msra.mxu0 0.0
    %150 = vmatprep.subr.mxu0 0.0
    %151 = vmatpush1.msra.mxu0 0.0
    %152 = vmatprep.subr.mxu0 0.0
    %153 = vmatpush1.msra.mxu0 0.0
    %154 = vmatprep.subr.mxu0 0.0
    %155 = vmatpush1.msra.mxu0 0.0
    %156 = vmatprep.subr.mxu0 0.0
    %157 = vmatpush1.msra.mxu0 0.0
    %158 = vmatprep.subr.mxu0 0.0
    %159 = vmatpush1.msra.mxu0 0.0
    %160 = vmatprep.subr.mxu0 0.0
    %161 = vmatpush1.msra.mxu0 0.0
    %162 = vmatprep.subr.mxu0 0.0
    %163 = vmatpush1.msra.mxu0 0.0
    %164 = vmatprep.subr.mxu0 0.0
    %165 = vmatpush1.msra.mxu0 0.0
    %166 = vmatprep.subr.mxu0 0.0
    %167 = vmatpush1.msra.mxu0 0.0
    %168 = vmatprep.subr.mxu0 0.0
    %169 = vmatpush1.msra.mxu0 0.0
    %170 = vmatprep.subr.mxu0 0.0
    %171 = vmatpush1.msra.mxu0 %v138
    %172 = vmatprep.subr.mxu0 0.0
    %173 = vmatpush2.msra.mxu0 0.0
    %174 = vmatprep.subr.mxu0 0.0
    %175 = vmatpush2.msra.mxu0 0.0
    %176 = vmatprep.subr.mxu0 0.0
    %177 = vmatpush2.msra.mxu0 0.0
    %178 = vmatprep.subr.mxu0 0.0
    %179 = vmatpush2.msra.mxu0 0.0
    %180 = vmatprep.subr.mxu0 0.0
    %181 = vmatpush2.msra.mxu0 0.0
    %182 = vmatprep.subr.mxu0 0.0
    %183 = vmatpush2.msra.mxu0 0.0
    %184 = vmatprep.subr.mxu0 0.0
    %185 = vmatpush2.msra.mxu0 0.0
    %186 = vmatprep.subr.mxu0 0.0
    %187 = vmatpush2.msra.mxu0 0.0
    %188 = vmatprep.subr.mxu0 0.0
    %189 = vmatpush2.msra.mxu0 0.0
    %190 = vmatprep.subr.mxu0 0.0
    %191 = vmatpush2.msra.mxu0 0.0
    %192 = vmatprep.subr.mxu0 0.0
    %193 = vmatpush2.msra.mxu0 0.0
    %194 = vmatprep.subr.mxu0 0.0
    %195 = vmatpush2.msra.mxu0 0.0
    %196 = vmatprep.subr.mxu0 0.0
    %197 = vmatpush2.msra.mxu0 0.0
    %198 = vmatprep.subr.mxu0 0.0
    %199 = vmatpush2.msra.mxu0 0.0
    %200 = vmatprep.subr.mxu0 0.0
    %201 = vmatpush2.msra.mxu0 0.0
    %202 = vmatprep.subr.mxu0 0.0
    %203 = vmatpush2.msra.mxu0 0.0
    %204 = vmatprep.mubr.f32.mxu0 0.0
    %205 = vmatmul.mubr.f32.gmra.mxu0 %v120
    %v206 = vpop.f32.mrf.mxu0
    %v207 = vadd.f32 0.0, %v206
    %v208 = vpop.f32.mrf.mxu0
    %209 = vmatprep.mubr.f32.mxu0 0.0
    %210 = vmatmul.mubr.f32.gmra.mxu0 %v123
    %v211 = vpop.f32.mrf.mxu0
    %v212 = vadd.f32 0.0, %v211
    %v213 = vpop.f32.mrf.mxu0
    %214 = vmatprep.mubr.f32.mxu0 0.0
    %215 = vmatmul.mubr.f32.gmra.mxu0 %v126
    %v216 = vpop.f32.mrf.mxu0
    %v217 = vadd.f32 0.0, %v216
    %v218 = vpop.f32.mrf.mxu0
    %219 = vmatprep.mubr.f32.mxu0 0.0
    %220 = vmatmul.mubr.f32.gmra.mxu0 %v129
    %v221 = vpop.f32.mrf.mxu0
    %v222 = vadd.f32 0.0, %v221
    %v223 = vpop.f32.mrf.mxu0
    %224 = vmatprep.mubr.f32.mxu0 0.0
    %225 = vmatmul.mubr.f32.gmra.mxu0 %v132
    %v226 = vpop.f32.mrf.mxu0
    %v227 = vadd.f32 0.0, %v226
    %v228 = vpop.f32.mrf.mxu0
    %229 = vmatprep.mubr.f32.mxu0 0.0
    %230 = vmatmul.mubr.f32.gmra.mxu0 %v135
    %v231 = vpop.f32.mrf.mxu0
    %v232 = vadd.f32 0.0, %v231
    %v233 = vpop.f32.mrf.mxu0
    %234 = vdwg.mxu0
    %v236 = vsel %vm118, %v106, 0
    %v239 = vsel %vm118, %v107, 0
    %v242 = vsel %vm118, %v108, 0
    %v245 = vsel %vm118, %v109, 0
    %v248 = vsel %vm118, %v110, 0
    %v251 = vsel %vm118, %v111, 0
    %v254 = vsel %vm19, %v67, 0
    %256 = vmatprep.subr.mxu0 0.0
    %257 = vmatpush1.msra.mxu0 0.0
    %258 = vmatprep.subr.mxu0 0.0
    %259 = vmatpush1.msra.mxu0 0.0
    %260 = vmatprep.subr.mxu0 0.0
    %261 = vmatpush1.msra.mxu0 0.0
    %262 = vmatprep.subr.mxu0 0.0
    %263 = vmatpush1.msra.mxu0 0.0
    %264 = vmatprep.subr.mxu0 0.0
    %265 = vmatpush1.msra.mxu0 0.0
    %266 = vmatprep.subr.mxu0 0.0
    %267 = vmatpush1.msra.mxu0 0.0
    %268 = vmatprep.subr.mxu0 0.0
    %269 = vmatpush1.msra.mxu0 0.0
    %270 = vmatprep.subr.mxu0 0.0
    %271 = vmatpush1.msra.mxu0 0.0
    %272 = vmatprep.subr.mxu0 0.0
    %273 = vmatpush1.msra.mxu0 0.0
    %274 = vmatprep.subr.mxu0 0.0
    %275 = vmatpush1.msra.mxu0 0.0
    %276 = vmatprep.subr.mxu0 0.0
    %277 = vmatpush1.msra.mxu0 0.0
    %278 = vmatprep.subr.mxu0 0.0
    %279 = vmatpush1.msra.mxu0 0.0
    %280 = vmatprep.subr.mxu0 0.0
    %281 = vmatpush1.msra.mxu0 0.0
    %282 = vmatprep.subr.mxu0 0.0
    %283 = vmatpush1.msra.mxu0 0.0
    %284 = vmatprep.subr.mxu0 0.0
    %285 = vmatpush1.msra.mxu0 0.0
    %286 = vmatprep.subr.mxu0 0.0
    %287 = vmatpush1.msra.mxu0 %v254
    %288 = vmatprep.subr.mxu0 0.0
    %289 = vmatpush2.msra.mxu0 0.0
    %290 = vmatprep.subr.mxu0 0.0
    %291 = vmatpush2.msra.mxu0 0.0
    %292 = vmatprep.subr.mxu0 0.0
    %293 = vmatpush2.msra.mxu0 0.0
    %294 = vmatprep.subr.mxu0 0.0
    %295 = vmatpush2.msra.mxu0 0.0
    %296 = vmatprep.subr.mxu0 0.0
    %297 = vmatpush2.msra.mxu0 0.0
    %298 = vmatprep.subr.mxu0 0.0
    %299 = vmatpush2.msra.mxu0 0.0
    %300 = vmatprep.subr.mxu0 0.0
    %301 = vmatpush2.msra.mxu0 0.0
    %302 = vmatprep.subr.mxu0 0.0
    %303 = vmatpush2.msra.mxu0 0.0
    %304 = vmatprep.subr.mxu0 0.0
    %305 = vmatpush2.msra.mxu0 0.0
    %306 = vmatprep.subr.mxu0 0.0
    %307 = vmatpush2.msra.mxu0 0.0
    %308 = vmatprep.subr.mxu0 0.0
    %309 = vmatpush2.msra.mxu0 0.0
    %310 = vmatprep.subr.mxu0 0.0
    %311 = vmatpush2.msra.mxu0 0.0
    %312 = vmatprep.subr.mxu0 0.0
    %313 = vmatpush2.msra.mxu0 0.0
    %314 = vmatprep.subr.mxu0 0.0
    %315 = vmatpush2.msra.mxu0 0.0
    %316 = vmatprep.subr.mxu0 0.0
    %317 = vmatpush2.msra.mxu0 0.0
    %318 = vmatprep.subr.mxu0 0.0
    %319 = vmatpush2.msra.mxu0 0.0
    %320 = vmatprep.mubr.f32.mxu0 0.0
    %321 = vmatmul.mubr.f32.gmra.mxu0 %v236
    %v322 = vpop.f32.mrf.mxu0
    %v323 = vadd.f32 %v207, %v322
    %v324 = vpop.f32.mrf.mxu0
    %325 = vmatprep.mubr.f32.mxu0 0.0
    %326 = vmatmul.mubr.f32.gmra.mxu0 %v239
    %v327 = vpop.f32.mrf.mxu0
    %v328 = vadd.f32 %v212, %v327
    %v329 = vpop.f32.mrf.mxu0
    %330 = vmatprep.mubr.f32.mxu0 0.0
    %331 = vmatmul.mubr.f32.gmra.mxu0 %v242
    %v332 = vpop.f32.mrf.mxu0
    %v333 = vadd.f32 %v217, %v332
    %v334 = vpop.f32.mrf.mxu0
    %335 = vmatprep.mubr.f32.mxu0 0.0
    %336 = vmatmul.mubr.f32.gmra.mxu0 %v245
    %v337 = vpop.f32.mrf.mxu0
    %v338 = vadd.f32 %v222, %v337
    %v339 = vpop.f32.mrf.mxu0
    %340 = vmatprep.mubr.f32.mxu0 0.0
    %341 = vmatmul.mubr.f32.gmra.mxu0 %v248
    %v342 = vpop.f32.mrf.mxu0
    %v343 = vadd.f32 %v227, %v342
    %v344 = vpop.f32.mrf.mxu0
    %345 = vmatprep.mubr.f32.mxu0 0.0
    %346 = vmatmul.mubr.f32.gmra.mxu0 %v251
    %v347 = vpop.f32.mrf.mxu0
    %v348 = vadd.f32 %v232, %v347
    %v349 = vpop.f32.mrf.mxu0
    %350 = vdwg.mxu0
    %v351 = vsub.f32 %v333, %v323
    %v352 = vsub.f32 %v338, %v328
    %v353 = vsub.f32 %v343, %v323
    %v354 = vsub.f32 %v348, %v328
    %v355 = vmul.f32 %v351, %v353
    %v356 = vmul.f32 %v352, %v354
    %vm357 = vcmask 15360
    %v358 = vsel %vm357, %v355, 0.0
    %359 = vadd.xlane.f32.xlu0 %v358
    %v360 = vpop.xlane.xlu0 %359
    %v361 = vsel %vm357, %v356, 0.0
    %362 = vadd.xlane.f32.xlu0 %v361
    %v363 = vpop.xlane.xlu0 %362
    %v364 = vmul.f32 %v351, %v351
    %v365 = vmul.f32 %v352, %v352
    %v366 = vsel %vm357, %v364, 0.0
    %367 = vadd.xlane.f32.xlu0 %v366
    %v368 = vpop.xlane.xlu0 %367
    %v369 = vsel %vm357, %v365, 0.0
    %370 = vadd.xlane.f32.xlu0 %v369
    %v371 = vpop.xlane.xlu0 %370
    %v372 = vmul.f32 %v353, %v353
    %v373 = vmul.f32 %v354, %v354
    %v374 = vsel %vm357, %v372, 0.0
    %375 = vadd.xlane.f32.xlu0 %v374
    %v376 = vpop.xlane.xlu0 %375
    %v377 = vsel %vm357, %v373, 0.0
    %378 = vadd.xlane.f32.xlu0 %v377
    %v379 = vpop.xlane.xlu0 %378
    %v380 = vmul.f32 %v368, %v376
    %v381 = vmul.f32 %v371, %v379
    %vm382 = vcmp.le.f32.partialorder %v380, 0.0
    %vm383 = vcmp.le.f32.partialorder %v381, 0.0
    %v384 = vsel %vm382, 1.0, %v380
    %v385 = vsel %vm383, 1.0, %v381
    %v386 = vrsqrt.pop %v384
    %v387 = vrsqrt.pop %v385
    %v388 = vmul.f32 %v360, %v386
    %v389 = vmul.f32 %v363, %v387
    %v390 = vmax.f32 %v388, -1.0
    %v391 = vmax.f32 %v389, -1.0
    %v392 = vmin.f32 %v390, 1.0
    %v393 = vmin.f32 %v391, 1.0
    %v394 = vand.u32 2147483647, %v392
    %v395 = vand.u32 2147483647, %v393
    %v396 = vmul.f32 %v394, -0.0012624911
    %v397 = vmul.f32 %v395, -0.0012624911
    %v398 = vadd.f32 %v396, 0.00667009
    %v399 = vadd.f32 %v397, 0.00667009
    %v400 = vmul.f32 %v398, %v394
    %v401 = vmul.f32 %v399, %v395
    %v402 = vsub.f32 %v400, 0.017088126
    %v403 = vsub.f32 %v401, 0.017088126
    %v404 = vmul.f32 %v402, %v394
    %v405 = vmul.f32 %v403, %v395
    %v406 = vadd.f32 %v404, 0.03089188
    %v407 = vadd.f32 %v405, 0.03089188
    %v408 = vmul.f32 %v406, %v394
    %v409 = vmul.f32 %v407, %v395
    %v410 = vsub.f32 %v408, 0.050174303
    %v411 = vsub.f32 %v409, 0.050174303
    %v412 = vmul.f32 %v410, %v394
    %v413 = vmul.f32 %v411, %v395
    %v414 = vadd.f32 %v412, 0.08897899
    %v415 = vadd.f32 %v413, 0.08897899
    %v416 = vmul.f32 %v414, %v394
    %v417 = vmul.f32 %v415, %v395
    %v418 = vsub.f32 %v416, 0.2145988
    %v419 = vsub.f32 %v417, 0.2145988
    %v420 = vmul.f32 %v418, %v394
    %v421 = vmul.f32 %v419, %v395
    %v422 = vadd.f32 %v420, 1.5707963
    %v423 = vadd.f32 %v421, 1.5707963
    %v424 = vsub.f32 1.0, %v394
    %v425 = vsub.f32 1.0, %v395
    %v426 = vrsqrt.pop %v424
    %v427 = vmul.f32 %v424, %v426
    %vm428 = vcmp.eq.f32.partialorder %v424, inf
    %v429 = vsel %vm428, %v424, %v427
    %vm430 = vcmp.eq.f32.partialorder %v424, 0.0
    %v431 = vand.u32 %v424, 2147483648
    %v432 = vsel %vm430, %v431, %v429
    %v433 = vrsqrt.pop %v425
    %v434 = vmul.f32 %v425, %v433
    %vm435 = vcmp.eq.f32.partialorder %v425, inf
    %v436 = vsel %vm435, %v425, %v434
    %vm437 = vcmp.eq.f32.partialorder %v425, 0.0
    %v438 = vand.u32 %v425, 2147483648
    %v439 = vsel %vm437, %v438, %v436
    %v440 = vmul.f32 %v422, %v432
    %v441 = vmul.f32 %v423, %v439
    %vm442 = vcmp.lt.f32.partialorder %v392, 0.0
    %vm443 = vcmp.lt.f32.partialorder %v393, 0.0
    %v444 = vsub.f32 3.1415927, %v440
    %v445 = vsub.f32 3.1415927, %v441
    %v446 = vsel %vm442, %v444, %v440
    %v447 = vsel %vm443, %v445, %v441
    %v448 = vmul.f32 %v446, 57.29578
    %v449 = vmul.f32 %v447, 57.29578
    %v450 = vsel %vm382, 0.0, %v448
    %v451 = vsel %vm383, 0.0, %v449
    %v452 = vsel %vm357, %v333, -inf
    %453 = vmax.xlane.f32.xlu0 %v452
    %v454 = vpop.xlane.xlu0 %453
    %v455 = vsel %vm357, %v338, -inf
    %456 = vmax.xlane.f32.xlu0 %v455
    %v457 = vpop.xlane.xlu0 %456
    %vm458 = vcmp.eq.f32.partialorder %v454, 0.0
    %vm459 = vcmp.eq.f32.partialorder %v457, 0.0
    %v460 = vsel %vm357, %v343, -inf
    %461 = vmax.xlane.f32.xlu0 %v460
    %v462 = vpop.xlane.xlu0 %461
    %v463 = vsel %vm357, %v348, -inf
    %464 = vmax.xlane.f32.xlu0 %v463
    %v465 = vpop.xlane.xlu0 %464
    %vm466 = vcmp.eq.f32.partialorder %v462, 0.0
    %vm467 = vcmp.eq.f32.partialorder %v465, 0.0
    %v468 = vsel %vm357, %v333, inf
    %469 = vmin.xlane.f32.xlu0 %v468
    %v470 = vpop.xlane.xlu0 %469
    %v471 = vsel %vm357, %v338, inf
    %472 = vmin.xlane.f32.xlu0 %v471
    %v473 = vpop.xlane.xlu0 %472
    %vm474 = vcmp.gt.f32.partialorder %v470, 0.0
    %vm475 = vcmp.gt.f32.partialorder %v473, 0.0
    %v476 = vsel %vm357, %v343, inf
    %477 = vmin.xlane.f32.xlu0 %v476
    %v478 = vpop.xlane.xlu0 %477
    %v479 = vsel %vm357, %v348, inf
    %480 = vmin.xlane.f32.xlu0 %v479
    %v481 = vpop.xlane.xlu0 %480
    %vm482 = vcmp.gt.f32.partialorder %v478, 0.0
    %vm483 = vcmp.gt.f32.partialorder %v481, 0.0
    %vm484 = vmand %vm458, %vm482
    %vm485 = vmand %vm459, %vm483
    %vm486 = vmand %vm466, %vm474
    %vm487 = vmand %vm467, %vm475
    %vm488 = vmand %vm458, %vm466
    %vm489 = vmand %vm459, %vm467
    %v490 = vsel %vm488, -1.0, %v450
    %v491 = vsel %vm489, -1.0, %v451
    %v492 = vsel %vm486, 0.0, %v490
    %v493 = vsel %vm487, 0.0, %v491
    %v494 = vsel %vm484, 0.0, %v492
    %v495 = vsel %vm485, 0.0, %v493
    %v496 = vsel %vm357, %v323, inf
    %497 = vmin.xlane.f32.xlu0 %v496
    %v498 = vpop.xlane.xlu0 %497
    %v499 = vsel %vm357, %v328, inf
    %500 = vmin.xlane.f32.xlu0 %v499
    %v501 = vpop.xlane.xlu0 %500
    %vm502 = vcmp.gt.f32.partialorder %v498, 0.0
    %vm503 = vcmp.gt.f32.partialorder %v501, 0.0
    %v504 = vsel %vm502, %v494, -2.0
    %v505 = vsel %vm503, %v495, -2.0
    %v506 = vld [vmem:[%s2 + $0x60] sm:$0xff]
    %v507 = vld [vmem:[%s2 + $0x68] sm:$0xff]
    %v508 = vld [vmem:[%s2 + $0x80] sm:$0xff]
    %v509 = vld [vmem:[%s2 + $0x88] sm:$0xff]
    %v510 = vmul.f32 %v504, %v508
    %v511 = vmul.f32 %v505, %v509
    %vm512 = vcmask 130048
    %v514 = vsel %vm512, %v506, 0
    %v517 = vsel %vm512, %v507, 0
    %519 = vmatprep.subr.mxu0 0.0
    %520 = vmatpush1.msra.mxu0 0.0
    %521 = vmatprep.subr.mxu0 0.0
    %522 = vmatpush1.msra.mxu0 0.0
    %523 = vmatprep.subr.mxu0 0.0
    %524 = vmatpush1.msra.mxu0 0.0
    %525 = vmatprep.subr.mxu0 0.0
    %526 = vmatpush1.msra.mxu0 0.0
    %527 = vmatprep.subr.mxu0 0.0
    %528 = vmatpush1.msra.mxu0 0.0
    %529 = vmatprep.subr.mxu0 0.0
    %530 = vmatpush1.msra.mxu0 0.0
    %531 = vmatprep.subr.mxu0 0.0
    %532 = vmatpush1.msra.mxu0 0.0
    %533 = vmatprep.subr.mxu0 0.0
    %534 = vmatpush1.msra.mxu0 0.0
    %535 = vmatprep.subr.mxu0 0.0
    %536 = vmatpush1.msra.mxu0 0.0
    %537 = vmatprep.subr.mxu0 0.0
    %538 = vmatpush1.msra.mxu0 0.0
    %539 = vmatprep.subr.mxu0 0.0
    %540 = vmatpush1.msra.mxu0 0.0
    %541 = vmatprep.subr.mxu0 0.0
    %542 = vmatpush1.msra.mxu0 0.0
    %543 = vmatprep.subr.mxu0 0.0
    %544 = vmatpush1.msra.mxu0 0.0
    %545 = vmatprep.subr.mxu0 0.0
    %546 = vmatpush1.msra.mxu0 0.0
    %547 = vmatprep.subr.mxu0 0.0
    %548 = vmatpush1.msra.mxu0 %v511
    %549 = vmatprep.subr.mxu0 0.0
    %550 = vmatpush1.msra.mxu0 %v510
    %551 = vmatprep.subr.mxu0 0.0
    %552 = vmatpush2.msra.mxu0 0.0
    %553 = vmatprep.subr.mxu0 0.0
    %554 = vmatpush2.msra.mxu0 0.0
    %555 = vmatprep.subr.mxu0 0.0
    %556 = vmatpush2.msra.mxu0 0.0
    %557 = vmatprep.subr.mxu0 0.0
    %558 = vmatpush2.msra.mxu0 0.0
    %559 = vmatprep.subr.mxu0 0.0
    %560 = vmatpush2.msra.mxu0 0.0
    %561 = vmatprep.subr.mxu0 0.0
    %562 = vmatpush2.msra.mxu0 0.0
    %563 = vmatprep.subr.mxu0 0.0
    %564 = vmatpush2.msra.mxu0 0.0
    %565 = vmatprep.subr.mxu0 0.0
    %566 = vmatpush2.msra.mxu0 0.0
    %567 = vmatprep.subr.mxu0 0.0
    %568 = vmatpush2.msra.mxu0 0.0
    %569 = vmatprep.subr.mxu0 0.0
    %570 = vmatpush2.msra.mxu0 0.0
    %571 = vmatprep.subr.mxu0 0.0
    %572 = vmatpush2.msra.mxu0 0.0
    %573 = vmatprep.subr.mxu0 0.0
    %574 = vmatpush2.msra.mxu0 0.0
    %575 = vmatprep.subr.mxu0 0.0
    %576 = vmatpush2.msra.mxu0 0.0
    %577 = vmatprep.subr.mxu0 0.0
    %578 = vmatpush2.msra.mxu0 0.0
    %579 = vmatprep.subr.mxu0 0.0
    %580 = vmatpush2.msra.mxu0 0.0
    %581 = vmatprep.subr.mxu0 0.0
    %582 = vmatpush2.msra.mxu0 0.0
    %583 = vmatprep.mubr.f32.mxu0 0.0
    %584 = vmatmul.mubr.f32.gmra.mxu0 %v514
    %v585 = vpop.f32.mrf.mxu0
    %v586 = vadd.f32 0.0, %v585
    %v587 = vpop.f32.mrf.mxu0
    %588 = vmatprep.mubr.f32.mxu0 0.0
    %589 = vmatmul.mubr.f32.gmra.mxu0 %v517
    %v590 = vpop.f32.mrf.mxu0
    %v591 = vadd.f32 0.0, %v590
    %v592 = vpop.f32.mrf.mxu0
    %593 = vdwg.mxu0
    %596 = vrot.lane.b32.xlu0 %v586, 2
    %v597 = vpop.permute.xlu0 %596
    %598 = vrot.lane.b32.xlu0 %v591, 2
    %v599 = vpop.permute.xlu0 %598
    %v602 = vsel %vm357, %v323, %v597
    %v603 = vsel %vm357, %v328, %v599
    %v604 = vld [vmem:[%s2 + $0x70] sm:$0xff]
    %v605 = vld [vmem:[%s2 + $0x78] sm:$0xff]
    %v606 = vld [vmem:[%s2 + $0x90] sm:$0xff]
    %v607 = vld [vmem:[%s2 + $0x98] sm:$0xff]
    %v608 = vld [vmem:[%s2 + $0xa0] sm:$0xff]
    %v609 = vld [vmem:[%s2 + $0xa8] sm:$0xff]
    %v610 = vld [vmem:[%s2 + $0xb0] sm:$0xff]
    %v611 = vld [vmem:[%s2 + $0xb8] sm:$0xff]
    %v612 = vld [vmem:[%s2 + $0xc0] sm:$0xff]
    %v613 = vld [vmem:[%s2 + $0xc8] sm:$0xff]
    %v614 = vld [vmem:[%s2 + $0xd0] sm:$0xff]
    %v616 = vsel %vm512, %v604, 0
    %v619 = vsel %vm512, %v605, 0
    %621 = vmatprep.subr.mxu0 0.0
    %622 = vmatpush1.msra.mxu0 0.0
    %623 = vmatprep.subr.mxu0 0.0
    %624 = vmatpush1.msra.mxu0 0.0
    %625 = vmatprep.subr.mxu0 0.0
    %626 = vmatpush1.msra.mxu0 0.0
    %627 = vmatprep.subr.mxu0 0.0
    %628 = vmatpush1.msra.mxu0 0.0
    %629 = vmatprep.subr.mxu0 0.0
    %630 = vmatpush1.msra.mxu0 0.0
    %631 = vmatprep.subr.mxu0 0.0
    %632 = vmatpush1.msra.mxu0 0.0
    %633 = vmatprep.subr.mxu0 0.0
    %634 = vmatpush1.msra.mxu0 0.0
    %635 = vmatprep.subr.mxu0 0.0
    %636 = vmatpush1.msra.mxu0 0.0
    %637 = vmatprep.subr.mxu0 0.0
    %638 = vmatpush1.msra.mxu0 0.0
    %639 = vmatprep.subr.mxu0 0.0
    %640 = vmatpush1.msra.mxu0 0.0
    %641 = vmatprep.subr.mxu0 0.0
    %642 = vmatpush1.msra.mxu0 0.0
    %643 = vmatprep.subr.mxu0 0.0
    %644 = vmatpush1.msra.mxu0 0.0
    %645 = vmatprep.subr.mxu0 0.0
    %646 = vmatpush1.msra.mxu0 0.0
    %647 = vmatprep.subr.mxu0 0.0
    %648 = vmatpush1.msra.mxu0 0.0
    %649 = vmatprep.subr.mxu0 0.0
    %650 = vmatpush1.msra.mxu0 %v603
    %651 = vmatprep.subr.mxu0 0.0
    %652 = vmatpush1.msra.mxu0 %v602
    %653 = vmatprep.subr.mxu0 0.0
    %654 = vmatpush2.msra.mxu0 0.0
    %655 = vmatprep.subr.mxu0 0.0
    %656 = vmatpush2.msra.mxu0 0.0
    %657 = vmatprep.subr.mxu0 0.0
    %658 = vmatpush2.msra.mxu0 0.0
    %659 = vmatprep.subr.mxu0 0.0
    %660 = vmatpush2.msra.mxu0 0.0
    %661 = vmatprep.subr.mxu0 0.0
    %662 = vmatpush2.msra.mxu0 0.0
    %663 = vmatprep.subr.mxu0 0.0
    %664 = vmatpush2.msra.mxu0 0.0
    %665 = vmatprep.subr.mxu0 0.0
    %666 = vmatpush2.msra.mxu0 0.0
    %667 = vmatprep.subr.mxu0 0.0
    %668 = vmatpush2.msra.mxu0 0.0
    %669 = vmatprep.subr.mxu0 0.0
    %670 = vmatpush2.msra.mxu0 0.0
    %671 = vmatprep.subr.mxu0 0.0
    %672 = vmatpush2.msra.mxu0 0.0
    %673 = vmatprep.subr.mxu0 0.0
    %674 = vmatpush2.msra.mxu0 0.0
    %675 = vmatprep.subr.mxu0 0.0
    %676 = vmatpush2.msra.mxu0 0.0
    %677 = vmatprep.subr.mxu0 0.0
    %678 = vmatpush2.msra.mxu0 0.0
    %679 = vmatprep.subr.mxu0 0.0
    %680 = vmatpush2.msra.mxu0 0.0
    %681 = vmatprep.subr.mxu0 0.0
    %682 = vmatpush2.msra.mxu0 0.0
    %683 = vmatprep.subr.mxu0 0.0
    %684 = vmatpush2.msra.mxu0 0.0
    %685 = vmatprep.mubr.f32.mxu0 0.0
    %686 = vmatmul.mubr.f32.gmra.mxu0 %v616
    %v687 = vpop.f32.mrf.mxu0
    %v688 = vadd.f32 0.0, %v687
    %v689 = vpop.f32.mrf.mxu0
    %690 = vmatprep.mubr.f32.mxu0 0.0
    %691 = vmatmul.mubr.f32.gmra.mxu0 %v619
    %v692 = vpop.f32.mrf.mxu0
    %v693 = vadd.f32 0.0, %v692
    %v694 = vpop.f32.mrf.mxu0
    %695 = vdwg.mxu0
    %vm696 = vcmask 64512
    %v698 = vsel %vm696, %v688, 0
    %v701 = vsel %vm696, %v693, 0
    %703 = vmatprep.subr.mxu0 0.0
    %704 = vmatpush1.msra.mxu0 0.0
    %705 = vmatprep.subr.mxu0 0.0
    %706 = vmatpush1.msra.mxu0 0.0
    %707 = vmatprep.subr.mxu0 0.0
    %708 = vmatpush1.msra.mxu0 0.0
    %709 = vmatprep.subr.mxu0 0.0
    %710 = vmatpush1.msra.mxu0 0.0
    %711 = vmatprep.subr.mxu0 0.0
    %712 = vmatpush1.msra.mxu0 0.0
    %713 = vmatprep.subr.mxu0 0.0
    %714 = vmatpush1.msra.mxu0 0.0
    %715 = vmatprep.subr.mxu0 0.0
    %716 = vmatpush1.msra.mxu0 0.0
    %717 = vmatprep.subr.mxu0 0.0
    %718 = vmatpush1.msra.mxu0 0.0
    %719 = vmatprep.subr.mxu0 0.0
    %720 = vmatpush1.msra.mxu0 0.0
    %721 = vmatprep.subr.mxu0 0.0
    %722 = vmatpush1.msra.mxu0 0.0
    %723 = vmatprep.subr.mxu0 0.0
    %724 = vmatpush1.msra.mxu0 0.0
    %725 = vmatprep.subr.mxu0 0.0
    %726 = vmatpush1.msra.mxu0 0.0
    %727 = vmatprep.subr.mxu0 0.0
    %728 = vmatpush1.msra.mxu0 0.0
    %729 = vmatprep.subr.mxu0 0.0
    %730 = vmatpush1.msra.mxu0 0.0
    %731 = vmatprep.subr.mxu0 0.0
    %732 = vmatpush1.msra.mxu0 0.0
    %733 = vmatprep.subr.mxu0 0.0
    %734 = vmatpush1.msra.mxu0 %v606
    %735 = vmatprep.subr.mxu0 0.0
    %736 = vmatpush2.msra.mxu0 0.0
    %737 = vmatprep.subr.mxu0 0.0
    %738 = vmatpush2.msra.mxu0 0.0
    %739 = vmatprep.subr.mxu0 0.0
    %740 = vmatpush2.msra.mxu0 0.0
    %741 = vmatprep.subr.mxu0 0.0
    %742 = vmatpush2.msra.mxu0 0.0
    %743 = vmatprep.subr.mxu0 0.0
    %744 = vmatpush2.msra.mxu0 0.0
    %745 = vmatprep.subr.mxu0 0.0
    %746 = vmatpush2.msra.mxu0 0.0
    %747 = vmatprep.subr.mxu0 0.0
    %748 = vmatpush2.msra.mxu0 0.0
    %749 = vmatprep.subr.mxu0 0.0
    %750 = vmatpush2.msra.mxu0 0.0
    %751 = vmatprep.subr.mxu0 0.0
    %752 = vmatpush2.msra.mxu0 0.0
    %753 = vmatprep.subr.mxu0 0.0
    %754 = vmatpush2.msra.mxu0 0.0
    %755 = vmatprep.subr.mxu0 0.0
    %756 = vmatpush2.msra.mxu0 0.0
    %757 = vmatprep.subr.mxu0 0.0
    %758 = vmatpush2.msra.mxu0 0.0
    %759 = vmatprep.subr.mxu0 0.0
    %760 = vmatpush2.msra.mxu0 0.0
    %761 = vmatprep.subr.mxu0 0.0
    %762 = vmatpush2.msra.mxu0 0.0
    %763 = vmatprep.subr.mxu0 0.0
    %764 = vmatpush2.msra.mxu0 0.0
    %765 = vmatprep.subr.mxu0 0.0
    %766 = vmatpush2.msra.mxu0 0.0
    %767 = vmatprep.mubr.f32.mxu0 0.0
    %768 = vmatmul.mubr.f32.gmra.mxu0 %v698
    %v769 = vpop.f32.mrf.mxu0
    %v770 = vadd.f32 0.0, %v769
    %v771 = vpop.f32.mrf.mxu0
    %772 = vmatprep.mubr.f32.mxu0 0.0
    %773 = vmatmul.mubr.f32.gmra.mxu0 %v701
    %v774 = vpop.f32.mrf.mxu0
    %v775 = vadd.f32 0.0, %v774
    %v776 = vpop.f32.mrf.mxu0
    %777 = vdwg.mxu0
    %v778 = vmax.f32 %v770, 0.0
    %v779 = vmax.f32 %v775, 0.0
    %780 = vmatprep.subr.mxu0 0.0
    %781 = vmatpush1.msra.mxu0 0.0
    %782 = vmatprep.subr.mxu0 0.0
    %783 = vmatpush1.msra.mxu0 0.0
    %784 = vmatprep.subr.mxu0 0.0
    %785 = vmatpush1.msra.mxu0 0.0
    %786 = vmatprep.subr.mxu0 0.0
    %787 = vmatpush1.msra.mxu0 0.0
    %788 = vmatprep.subr.mxu0 0.0
    %789 = vmatpush1.msra.mxu0 0.0
    %790 = vmatprep.subr.mxu0 0.0
    %791 = vmatpush1.msra.mxu0 0.0
    %792 = vmatprep.subr.mxu0 0.0
    %793 = vmatpush1.msra.mxu0 0.0
    %794 = vmatprep.subr.mxu0 0.0
    %795 = vmatpush1.msra.mxu0 0.0
    %796 = vmatprep.subr.mxu0 0.0
    %797 = vmatpush1.msra.mxu0 0.0
    %798 = vmatprep.subr.mxu0 0.0
    %799 = vmatpush1.msra.mxu0 0.0
    %800 = vmatprep.subr.mxu0 0.0
    %801 = vmatpush1.msra.mxu0 0.0
    %802 = vmatprep.subr.mxu0 0.0
    %803 = vmatpush1.msra.mxu0 0.0
    %804 = vmatprep.subr.mxu0 0.0
    %805 = vmatpush1.msra.mxu0 0.0
    %806 = vmatprep.subr.mxu0 0.0
    %807 = vmatpush1.msra.mxu0 0.0
    %808 = vmatprep.subr.mxu0 0.0
    %809 = vmatpush1.msra.mxu0 %v779
    %810 = vmatprep.subr.mxu0 0.0
    %811 = vmatpush1.msra.mxu0 %v778
    %812 = vmatprep.subr.mxu0 0.0
    %813 = vmatpush2.msra.mxu0 0.0
    %814 = vmatprep.subr.mxu0 0.0
    %815 = vmatpush2.msra.mxu0 0.0
    %816 = vmatprep.subr.mxu0 0.0
    %817 = vmatpush2.msra.mxu0 0.0
    %818 = vmatprep.subr.mxu0 0.0
    %819 = vmatpush2.msra.mxu0 0.0
    %820 = vmatprep.subr.mxu0 0.0
    %821 = vmatpush2.msra.mxu0 0.0
    %822 = vmatprep.subr.mxu0 0.0
    %823 = vmatpush2.msra.mxu0 0.0
    %824 = vmatprep.subr.mxu0 0.0
    %825 = vmatpush2.msra.mxu0 0.0
    %826 = vmatprep.subr.mxu0 0.0
    %827 = vmatpush2.msra.mxu0 0.0
    %828 = vmatprep.subr.mxu0 0.0
    %829 = vmatpush2.msra.mxu0 0.0
    %830 = vmatprep.subr.mxu0 0.0
    %831 = vmatpush2.msra.mxu0 0.0
    %832 = vmatprep.subr.mxu0 0.0
    %833 = vmatpush2.msra.mxu0 0.0
    %834 = vmatprep.subr.mxu0 0.0
    %835 = vmatpush2.msra.mxu0 0.0
    %836 = vmatprep.subr.mxu0 0.0
    %837 = vmatpush2.msra.mxu0 0.0
    %838 = vmatprep.subr.mxu0 0.0
    %839 = vmatpush2.msra.mxu0 0.0
    %840 = vmatprep.subr.mxu0 0.0
    %841 = vmatpush2.msra.mxu0 0.0
    %842 = vmatprep.subr.mxu0 0.0
    %843 = vmatpush2.msra.mxu0 0.0
    %844 = vmatprep.mubr.f32.mxu0 0.0
    %845 = vmatmul.mubr.f32.gmra.mxu0 %v616
    %v846 = vpop.f32.mrf.mxu0
    %v847 = vadd.f32 0.0, %v846
    %v848 = vpop.f32.mrf.mxu0
    %849 = vmatprep.mubr.f32.mxu0 0.0
    %850 = vmatmul.mubr.f32.gmra.mxu0 %v619
    %v851 = vpop.f32.mrf.mxu0
    %v852 = vadd.f32 0.0, %v851
    %v853 = vpop.f32.mrf.mxu0
    %854 = vdwg.mxu0
    %vm855 = vcmask 261120
    %v857 = vsel %vm855, %v847, 0
    %v860 = vsel %vm855, %v852, 0
    %862 = vmatprep.subr.mxu0 0.0
    %863 = vmatpush1.msra.mxu0 0.0
    %864 = vmatprep.subr.mxu0 0.0
    %865 = vmatpush1.msra.mxu0 0.0
    %866 = vmatprep.subr.mxu0 0.0
    %867 = vmatpush1.msra.mxu0 0.0
    %868 = vmatprep.subr.mxu0 0.0
    %869 = vmatpush1.msra.mxu0 0.0
    %870 = vmatprep.subr.mxu0 0.0
    %871 = vmatpush1.msra.mxu0 0.0
    %872 = vmatprep.subr.mxu0 0.0
    %873 = vmatpush1.msra.mxu0 0.0
    %874 = vmatprep.subr.mxu0 0.0
    %875 = vmatpush1.msra.mxu0 0.0
    %876 = vmatprep.subr.mxu0 0.0
    %877 = vmatpush1.msra.mxu0 0.0
    %878 = vmatprep.subr.mxu0 0.0
    %879 = vmatpush1.msra.mxu0 0.0
    %880 = vmatprep.subr.mxu0 0.0
    %881 = vmatpush1.msra.mxu0 0.0
    %882 = vmatprep.subr.mxu0 0.0
    %883 = vmatpush1.msra.mxu0 0.0
    %884 = vmatprep.subr.mxu0 0.0
    %885 = vmatpush1.msra.mxu0 0.0
    %886 = vmatprep.subr.mxu0 0.0
    %887 = vmatpush1.msra.mxu0 %v610
    %888 = vmatprep.subr.mxu0 0.0
    %889 = vmatpush1.msra.mxu0 %v609
    %890 = vmatprep.subr.mxu0 0.0
    %891 = vmatpush1.msra.mxu0 %v608
    %892 = vmatprep.subr.mxu0 0.0
    %893 = vmatpush1.msra.mxu0 %v607
    %894 = vmatprep.subr.mxu0 0.0
    %895 = vmatpush2.msra.mxu0 0.0
    %896 = vmatprep.subr.mxu0 0.0
    %897 = vmatpush2.msra.mxu0 0.0
    %898 = vmatprep.subr.mxu0 0.0
    %899 = vmatpush2.msra.mxu0 0.0
    %900 = vmatprep.subr.mxu0 0.0
    %901 = vmatpush2.msra.mxu0 0.0
    %902 = vmatprep.subr.mxu0 0.0
    %903 = vmatpush2.msra.mxu0 0.0
    %904 = vmatprep.subr.mxu0 0.0
    %905 = vmatpush2.msra.mxu0 0.0
    %906 = vmatprep.subr.mxu0 0.0
    %907 = vmatpush2.msra.mxu0 0.0
    %908 = vmatprep.subr.mxu0 0.0
    %909 = vmatpush2.msra.mxu0 0.0
    %910 = vmatprep.subr.mxu0 0.0
    %911 = vmatpush2.msra.mxu0 0.0
    %912 = vmatprep.subr.mxu0 0.0
    %913 = vmatpush2.msra.mxu0 0.0
    %914 = vmatprep.subr.mxu0 0.0
    %915 = vmatpush2.msra.mxu0 0.0
    %916 = vmatprep.subr.mxu0 0.0
    %917 = vmatpush2.msra.mxu0 0.0
    %918 = vmatprep.subr.mxu0 0.0
    %919 = vmatpush2.msra.mxu0 0.0
    %920 = vmatprep.subr.mxu0 0.0
    %921 = vmatpush2.msra.mxu0 0.0
    %922 = vmatprep.subr.mxu0 0.0
    %923 = vmatpush2.msra.mxu0 0.0
    %924 = vmatprep.subr.mxu0 0.0
    %925 = vmatpush2.msra.mxu0 0.0
    %926 = vmatprep.mubr.f32.mxu0 0.0
    %927 = vmatmul.mubr.f32.gmra.mxu0 %v857
    %v928 = vpop.f32.mrf.mxu0
    %v929 = vadd.f32 0.0, %v928
    %v930 = vpop.f32.mrf.mxu0
    %931 = vmatprep.mubr.f32.mxu0 0.0
    %932 = vmatmul.mubr.f32.gmra.mxu0 %v860
    %v933 = vpop.f32.mrf.mxu0
    %v934 = vadd.f32 0.0, %v933
    %v935 = vpop.f32.mrf.mxu0
    %936 = vdwg.mxu0
    %v937 = vmax.f32 %v929, 0.0
    %v938 = vmax.f32 %v934, 0.0
    %v939 = vsel %vm855, %v937, 0.0
    %v940 = vsel %vm855, %v938, 0.0
    %v941 = vadd.f32 %v939, %v940
    %v942 = vrot.slane %v941, 4
    %v943 = vadd.f32 %v941, %v942
    %v944 = vrot.slane %v943, 2
    %v945 = vadd.f32 %v943, %v944
    %v946 = vrot.slane %v945, 1
    %v947 = vadd.f32 %v945, %v946
    %v949 = vsel %vm855, %v947, 0
    %951 = vmatprep.subr.mxu0 0.0
    %952 = vmatpush1.msra.mxu0 0.0
    %953 = vmatprep.subr.mxu0 0.0
    %954 = vmatpush1.msra.mxu0 0.0
    %955 = vmatprep.subr.mxu0 0.0
    %956 = vmatpush1.msra.mxu0 0.0
    %957 = vmatprep.subr.mxu0 0.0
    %958 = vmatpush1.msra.mxu0 0.0
    %959 = vmatprep.subr.mxu0 0.0
    %960 = vmatpush1.msra.mxu0 0.0
    %961 = vmatprep.subr.mxu0 0.0
    %962 = vmatpush1.msra.mxu0 0.0
    %963 = vmatprep.subr.mxu0 0.0
    %964 = vmatpush1.msra.mxu0 0.0
    %965 = vmatprep.subr.mxu0 0.0
    %966 = vmatpush1.msra.mxu0 0.0
    %967 = vmatprep.subr.mxu0 0.0
    %968 = vmatpush1.msra.mxu0 0.0
    %969 = vmatprep.subr.mxu0 0.0
    %970 = vmatpush1.msra.mxu0 0.0
    %971 = vmatprep.subr.mxu0 0.0
    %972 = vmatpush1.msra.mxu0 0.0
    %973 = vmatprep.subr.mxu0 0.0
    %974 = vmatpush1.msra.mxu0 0.0
    %975 = vmatprep.subr.mxu0 0.0
    %976 = vmatpush1.msra.mxu0 %v614
    %977 = vmatprep.subr.mxu0 0.0
    %978 = vmatpush1.msra.mxu0 %v613
    %979 = vmatprep.subr.mxu0 0.0
    %980 = vmatpush1.msra.mxu0 %v612
    %981 = vmatprep.subr.mxu0 0.0
    %982 = vmatpush1.msra.mxu0 %v611
    %983 = vmatprep.subr.mxu0 0.0
    %984 = vmatpush2.msra.mxu0 0.0
    %985 = vmatprep.subr.mxu0 0.0
    %986 = vmatpush2.msra.mxu0 0.0
    %987 = vmatprep.subr.mxu0 0.0
    %988 = vmatpush2.msra.mxu0 0.0
    %989 = vmatprep.subr.mxu0 0.0
    %990 = vmatpush2.msra.mxu0 0.0
    %991 = vmatprep.subr.mxu0 0.0
    %992 = vmatpush2.msra.mxu0 0.0
    %993 = vmatprep.subr.mxu0 0.0
    %994 = vmatpush2.msra.mxu0 0.0
    %995 = vmatprep.subr.mxu0 0.0
    %996 = vmatpush2.msra.mxu0 0.0
    %997 = vmatprep.subr.mxu0 0.0
    %998 = vmatpush2.msra.mxu0 0.0
    %999 = vmatprep.subr.mxu0 0.0
    %1000 = vmatpush2.msra.mxu0 0.0
    %1001 = vmatprep.subr.mxu0 0.0
    %1002 = vmatpush2.msra.mxu0 0.0
    %1003 = vmatprep.subr.mxu0 0.0
    %1004 = vmatpush2.msra.mxu0 0.0
    %1005 = vmatprep.subr.mxu0 0.0
    %1006 = vmatpush2.msra.mxu0 0.0
    %1007 = vmatprep.subr.mxu0 0.0
    %1008 = vmatpush2.msra.mxu0 0.0
    %1009 = vmatprep.subr.mxu0 0.0
    %1010 = vmatpush2.msra.mxu0 0.0
    %1011 = vmatprep.subr.mxu0 0.0
    %1012 = vmatpush2.msra.mxu0 0.0
    %1013 = vmatprep.subr.mxu0 0.0
    %1014 = vmatpush2.msra.mxu0 0.0
    %1015 = vmatprep.mubr.f32.mxu0 0.0
    %1016 = vmatmul.mubr.f32.gmra.mxu0 %v949
    %v1017 = vpop.f32.mrf.mxu0
    %v1018 = vadd.f32 0.0, %v1017
    %v1019 = vpop.f32.mrf.mxu0
    %1020 = vdwg.mxu0
    %vm1021 = vcmask 8192
    %1022 = vst.msk [vmem:[#allocation2] sm:$0x1] %vm1021, %v1018
    // Predicated region
    $region14: #{_forward_impl.1} parent=1 // pred_check
      _
    $region15: #{_forward_impl.1} parent=1 // pred_check_branch
      %1024 = sbr.rel (0) target = $region17
    $region16: #{_forward_impl.1} parent=1 // pred_region
      %s1026 = ssub.s32 16, 16
      %1027 = vsyncadd [#allocation3], %s1026
      %s1029 = sshll.u32 [#allocation2], 4
      %s1030 = int_to_ptr.vmem [resolvable:$true] %s1029
      %1032 = dma.vmem_to_hbm [thread:$0]  %s1030, 16, %s3, [#allocation3]
    $region17: #{_forward_impl.1} parent=1 // pred_fallthru
      _
    // Predicated region
    $region18: #{_forward_impl.1} parent=1 // pred_check
      _
    $region19: #{_forward_impl.1} parent=1 // pred_check_branch
      %1034 = sbr.rel (0) target = $region21
    $region20: #{_forward_impl.1} parent=1 // pred_region
      %1035 = dma.done [#allocation3], 16
    $region21: #{_forward_impl.1} parent=1 // pred_fallthru
      _
    %1036 = vsyncpa [#allocation3], 1

</llo_original>
